<compile_context>
chip_gen: v5e
topology: v5e:2x2
jax: 0.10.0
libtpu: 0.0.40
codegen_flags: <defaults>
</compile_context>

<pallas_src>
import functools

import jax
import jax.numpy as jnp
from jax import lax
from jax.experimental import pallas as pl
from jax.experimental.pallas import tpu as pltpu

LANE = 128
SUBLANE = 8
MAX_BLOCK_ROWS = 1024  # 1024 * 128 * 4 B = 512 KiB per f32 stream per buffer


# --------------------------------------------------------------------------
# Kernel: elementwise LDAM-adjusted BCE-with-logits, chunk-wise partial sums
# --------------------------------------------------------------------------
def _ldam_kernel(m1_ref, x_ref, t_ref, out_ref, acc_ref, *, s, n,
                 blocks_per_chunk):
    p = pl.program_id(0)  # chunk index  ("parallel": megacore split on v7x)
    i = pl.program_id(1)  # block-in-chunk ("arbitrary": reduction axis)
    block_rows, lane = x_ref.shape  # static block shape

    @pl.when(i == 0)
    def _():
        acc_ref[...] = jnp.zeros_like(acc_ref)

    # In-kernel validity mask from the UNCLAMPED global flat element index.
    # Covers the <1024-element pad, the overrun of the last real block, and
    # the fully out-of-range dummy blocks of the last chunk.
    g = p * blocks_per_chunk + i
    row = lax.broadcasted_iota(jnp.int32, (block_rows, lane), 0)
    col = lax.broadcasted_iota(jnp.int32, (block_rows, lane), 1)
    flat = (g * block_rows + row) * lane + col
    valid = flat < n

    # Sanitize potentially-garbage tail values BEFORE any exp/log.
    x = jnp.where(valid, x_ref[...].astype(jnp.float32), 0.0)
    t = jnp.where(valid, t_ref[...].astype(jnp.float32), 0.0)

    m1 = m1_ref[0]  # foreground class margin (SMEM scalar)

    # LDAM: subtract the class margin where target == 1, then scale by s.
    z = jnp.where(t == 1.0, x - m1 * t, x)
    logits = s * z

    # Numerically stable binary_cross_entropy_with_logits (reduction='none').
    loss = (jnp.maximum(logits, 0.0) - logits * t
            + jnp.log1p(jnp.exp(-jnp.abs(logits))))

    # Vector accumulation only (VPU); masked by select, not multiply.
    acc_ref[...] += jnp.where(valid, loss, 0.0)

    # Once per chunk: fold the block-sized accumulator into this chunk's
    # (8, 128) partial-sum row (static, tile-aligned slices only).
    @pl.when(i == pl.num_programs(1) - 1)
    def _():
        part = acc_ref[0:SUBLANE, :]
        for k in range(1, block_rows // SUBLANE):
            part = part + acc_ref[k * SUBLANE:(k + 1) * SUBLANE, :]
        out_ref[...] = part


# --------------------------------------------------------------------------
# Wrapper
# --------------------------------------------------------------------------
def ldam_loss(inputs, targets, *, max_m=0.5, s=30.0):
    """LDAMLoss.forward(inputs, targets) -> scalar loss (mean reduction)."""
    n = inputs.size

    # --- class pixel counts + class margins (tiny scalar glue, plain JAX) ---
    bg = jnp.sum(targets == 0).astype(jnp.float32)
    fg = jnp.sum(targets == 1).astype(jnp.float32)
    cls_num = jnp.stack([bg, fg])
    m_list = 1.0 / jnp.sqrt(jnp.sqrt(cls_num))
    m_list = m_list * (max_m / jnp.max(m_list))
    m1 = m_list[1:2]  # shape (1,): margin for the foreground class

    # --- lane-dense (rows, 128) view; pad to a multiple of 8*128 elements ---
    x = inputs.reshape(-1)
    t = targets.reshape(-1)  # keep stored dtype; cast happens in-kernel
    pad = (-n) % (SUBLANE * LANE)
    if pad:
        x = jnp.pad(x, (0, pad))
        t = jnp.pad(t, (0, pad))
    rows = (n + pad) // LANE  # multiple of 8, >= 8
    x2 = x.reshape(rows, LANE)
    t2 = t.reshape(rows, LANE)

    # Block shape: full array if small, else 1024 rows.  Two-way chunk split
    # (leading "parallel" axis) when there are >= 2 blocks, for v7x megacore.
    block_rows = rows if rows <= MAX_BLOCK_ROWS else MAX_BLOCK_ROWS
    blocks_total = pl.cdiv(rows, block_rows)
    n_par = 2 if blocks_total >= 2 else 1
    bpc = pl.cdiv(blocks_total, n_par)  # blocks per chunk (inner grid extent)
    last_block = blocks_total - 1

    def tile_map(p_, i_):
        # Clamp dummy trailing blocks of the last chunk onto the last real
        # block; the kernel masks them out via the unclamped flat index.
        return (jnp.minimum(p_ * bpc + i_, last_block), 0)

    tile_spec = pl.BlockSpec((block_rows, LANE), tile_map)

    partials = pl.pallas_call(
        functools.partial(_ldam_kernel, s=float(s), n=n, blocks_per_chunk=bpc),
        out_shape=jax.ShapeDtypeStruct((n_par * SUBLANE, LANE), jnp.float32),
        grid=(n_par, bpc),
        in_specs=[
            pl.BlockSpec(memory_space=pltpu.SMEM),  # m1 scalar
            tile_spec,                              # inputs
            tile_spec,                              # targets
        ],
        out_specs=pl.BlockSpec((SUBLANE, LANE), lambda p_, i_: (p_, 0)),
        scratch_shapes=[pltpu.VMEM((block_rows, LANE), jnp.float32)],
        compiler_params=pltpu.CompilerParams(
            dimension_semantics=("parallel", "arbitrary"),
        ),
    )(m1, x2, t2)

    # Tiny final reduce (<= 2048 f32) + 'mean' reduction, left to XLA.
    return jnp.sum(partials) / jnp.float32(n)


# --------------------------------------------------------------------------
# Pure-JAX reference (mirrors the PyTorch LDAMLoss semantics)
# --------------------------------------------------------------------------
def _ldam_loss_ref(inputs, targets, *, max_m=0.5, s=30.0):
    x = inputs.astype(jnp.float32)
    tf = targets.astype(jnp.float32)

    bg = jnp.sum(targets == 0).astype(jnp.float32)
    fg = jnp.sum(targets == 1).astype(jnp.float32)
    cls_num = jnp.stack([bg, fg])
    m_list = 1.0 / jnp.sqrt(jnp.sqrt(cls_num))
    m_list = m_list * (max_m / jnp.max(m_list))

    margin = m_list[1] * tf
    adjusted = x - margin
    out = jnp.where(targets == 1, adjusted, x)
    logits = s * out
    bce = (jnp.maximum(logits, 0.0) - logits * tf
           + jnp.log1p(jnp.exp(-jnp.abs(logits))))
    return jnp.mean(bce)


if __name__ == "__main__":
    key = jax.random.PRNGKey(0)

    test_cases = [
        # (shape, target dtype)  -- imbalanced binary masks
        ((2, 1, 16, 16), jnp.float32),    # n = 512   -> pad to 1024, 1 block
        ((2, 1, 30, 30), jnp.int32),      # n = 1800  -> pad to 2048, int mask
        ((4, 1, 160, 160), jnp.float32),  # n = 102400 -> 800 rows, 1 block
        ((12, 1, 160, 160), jnp.float32), # n = 307200 -> 2400 rows, 3 blocks,
                                          #   2 chunks + clamped dummy block
    ]

    for idx, (shape, tdtype) in enumerate(test_cases):
        k1, k2 = jax.random.split(jax.random.fold_in(key, idx))
        inputs = jax.random.normal(k1, shape, dtype=jnp.float32)
        targets = (jax.random.uniform(k2, shape) < 0.2).astype(tdtype)

        loss = jax.block_until_ready(ldam_loss(inputs, targets))
        ref = _ldam_loss_ref(inputs, targets)

        assert jnp.isfinite(loss), f"loss not finite for shape {shape}"
        assert jnp.allclose(loss, ref, rtol=1e-4, atol=1e-4), (shape, loss, ref)

    print("KERNEL_OK")
</pallas_src>

<mosaic_0001>
module attributes {stable_mosaic.version = 11 : i64} {
  func.func @_ldam_kernel(%arg0: i32, %arg1: i32, %arg2: memref<1xf32, #tpu.memory_space<smem>>, %arg3: memref<8x128xf32, #tpu.memory_space<vmem>>, %arg4: memref<8x128xf32, #tpu.memory_space<vmem>>, %arg5: memref<8x128xf32, #tpu.memory_space<vmem>>, %arg6: memref<8x128xf32, #tpu.memory_space<vmem>>) attributes {dimension_semantics = [#tpu.dimension_semantics<parallel>, #tpu.dimension_semantics<arbitrary>], iteration_bounds = array<i64: 1, 1>, scalar_prefetch = 0 : i64, scratch_operands = 1 : i64, tpu.core_type = #tpu.core_type<tc>, window_params = [{transform_indices = @transform_0, window_bounds = array<i64: 1>}, {transform_indices = @transform_1, window_bounds = array<i64: 8, 128>}, {transform_indices = @transform_2, window_bounds = array<i64: 8, 128>}, {transform_indices = @transform_3, window_bounds = array<i64: 8, 128>}]} {
    %c0_i32 = arith.constant 0 : i32
    %0 = arith.cmpi eq, %arg1, %c0_i32 : i32
    %1 = arith.extui %0 : i1 to i32
    %c0_i32_0 = arith.constant 0 : i32
    %2 = arith.cmpi ne, %1, %c0_i32_0 : i32
    scf.if %2 {
      %cst_17 = arith.constant 0.000000e+00 : f32
      %48 = vector.broadcast %cst_17 : f32 to vector<8x128xf32>
      %c0_18 = arith.constant 0 : index
      %c0_19 = arith.constant 0 : index
      %49 = vector.load %arg6[%c0_18, %c0_19] : memref<8x128xf32, #tpu.memory_space<vmem>>, vector<8x128xf32>
      tpu.vector_store %arg6[%c0_18, %c0_19], %48 {strides = array<i32>} : memref<8x128xf32, #tpu.memory_space<vmem>>, vector<8x128xf32>,
    } else {
    }
    %c1_i32 = arith.constant 1 : i32
    %3 = arith.muli %arg0, %c1_i32 : i32
    %4 = arith.addi %3, %arg1 : i32
    %5 = tpu.iota {dimensions = array<i32: 0>} : vector<8x128xi32>
    %6 = tpu.iota {dimensions = array<i32: 1>} : vector<8x128xi32>
    %c8_i32 = arith.constant 8 : i32
    %7 = arith.muli %4, %c8_i32 : i32
    %8 = vector.broadcast %7 : i32 to vector<8x128xi32>
    %9 = arith.addi %8, %5 : vector<8x128xi32>
    %c128_i32 = arith.constant 128 : i32
    %10 = vector.broadcast %c128_i32 : i32 to vector<8x128xi32>
    %11 = arith.muli %9, %10 : vector<8x128xi32>
    %12 = arith.addi %11, %6 : vector<8x128xi32>
    %c512_i32 = arith.constant 512 : i32
    %13 = vector.broadcast %c512_i32 : i32 to vector<8x128xi32>
    %14 = arith.cmpi slt, %12, %13 : vector<8x128xi32>
    %c0 = arith.constant 0 : index
    %c0_1 = arith.constant 0 : index
    %15 = vector.load %arg3[%c0, %c0_1] : memref<8x128xf32, #tpu.memory_space<vmem>>, vector<8x128xf32>
    %cst = arith.constant 0.000000e+00 : f32
    %16 = vector.broadcast %cst : f32 to vector<8x128xf32>
    %17 = arith.select %14, %15, %16 : vector<8x128xi1>, vector<8x128xf32>
    %c0_2 = arith.constant 0 : index
    %c0_3 = arith.constant 0 : index
    %18 = vector.load %arg4[%c0_2, %c0_3] : memref<8x128xf32, #tpu.memory_space<vmem>>, vector<8x128xf32>
    %cst_4 = arith.constant 0.000000e+00 : f32
    %19 = vector.broadcast %cst_4 : f32 to vector<8x128xf32>
    %20 = arith.select %14, %18, %19 : vector<8x128xi1>, vector<8x128xf32>
    %c0_5 = arith.constant 0 : index
    %21 = memref.load %arg2[%c0_5] : memref<1xf32, #tpu.memory_space<smem>>
    %cst_6 = arith.constant 1.000000e+00 : f32
    %22 = vector.broadcast %cst_6 : f32 to vector<8x128xf32>
    %23 = arith.cmpf oeq, %20, %22 : vector<8x128xf32>
    %24 = vector.broadcast %21 : f32 to vector<8x128xf32>
    %25 = arith.mulf %24, %20 : vector<8x128xf32>
    %26 = arith.subf %17, %25 : vector<8x128xf32>
    %27 = arith.select %23, %26, %17 : vector<8x128xi1>, vector<8x128xf32>
    %cst_7 = arith.constant 3.000000e+01 : f32
    %28 = vector.broadcast %cst_7 : f32 to vector<8x128xf32>
    %29 = arith.mulf %28, %27 : vector<8x128xf32>
    %cst_8 = arith.constant 0.000000e+00 : f32
    %30 = vector.broadcast %cst_8 : f32 to vector<8x128xf32>
    %31 = arith.maximumf %29, %30 : vector<8x128xf32>
    %32 = arith.mulf %29, %20 : vector<8x128xf32>
    %33 = arith.subf %31, %32 : vector<8x128xf32>
    %34 = math.absf %29 : vector<8x128xf32>
    %cst_9 = arith.constant 0.000000e+00 : f32
    %35 = vector.broadcast %cst_9 : f32 to vector<8x128xf32>
    %36 = arith.subf %35, %34 : vector<8x128xf32>
    %37 = math.exp %36 : vector<8x128xf32>
    %38 = math.log1p %37 : vector<8x128xf32>
    %39 = arith.addf %33, %38 : vector<8x128xf32>
    %c0_10 = arith.constant 0 : index
    %c0_11 = arith.constant 0 : index
    %40 = vector.load %arg6[%c0_10, %c0_11] : memref<8x128xf32, #tpu.memory_space<vmem>>, vector<8x128xf32>
    %cst_12 = arith.constant 0.000000e+00 : f32
    %41 = vector.broadcast %cst_12 : f32 to vector<8x128xf32>
    %42 = arith.select %14, %39, %41 : vector<8x128xi1>, vector<8x128xf32>
    %43 = arith.addf %40, %42 : vector<8x128xf32>
    %c0_13 = arith.constant 0 : index
    %c0_14 = arith.constant 0 : index
    %44 = vector.load %arg6[%c0_13, %c0_14] : memref<8x128xf32, #tpu.memory_space<vmem>>, vector<8x128xf32>
    tpu.vector_store %arg6[%c0_13, %c0_14], %43 {strides = array<i32>} : memref<8x128xf32, #tpu.memory_space<vmem>>, vector<8x128xf32>,
    %c0_i32_15 = arith.constant 0 : i32
    %45 = arith.cmpi eq, %arg1, %c0_i32_15 : i32
    %46 = arith.extui %45 : i1 to i32
    %c0_i32_16 = arith.constant 0 : i32
    %47 = arith.cmpi ne, %46, %c0_i32_16 : i32
    scf.if %47 {
      %c0_17 = arith.constant 0 : index
      %c0_18 = arith.constant 0 : index
      %48 = vector.load %arg6[%c0_17, %c0_18] : memref<8x128xf32, #tpu.memory_space<vmem>>, vector<8x128xf32>
      %c0_19 = arith.constant 0 : index
      %c0_20 = arith.constant 0 : index
      %49 = vector.load %arg5[%c0_19, %c0_20] : memref<8x128xf32, #tpu.memory_space<vmem>>, vector<8x128xf32>
      tpu.vector_store %arg5[%c0_19, %c0_20], %48 {strides = array<i32>} : memref<8x128xf32, #tpu.memory_space<vmem>>, vector<8x128xf32>,
    } else {
    }
    return
  }
  func.func @transform_0(%arg0: i32, %arg1: i32) -> i32 {
    %c0_i32 = arith.constant 0 : i32
    %c0_i32_0 = arith.constant 0 : i32
    return %c0_i32 : i32
  }
  func.func @transform_1(%arg0: i32, %arg1: i32) -> (i32, i32) {
    %c1_i32 = arith.constant 1 : i32
    %0 = arith.muli %arg0, %c1_i32 : i32
    %1 = arith.addi %0, %arg1 : i32
    %c0_i32 = arith.constant 0 : i32
    %2 = arith.minsi %1, %c0_i32 : i32
    %c0_i32_0 = arith.constant 0 : i32
    %c0_i32_1 = arith.constant 0 : i32
    return %2, %c0_i32_0 : i32, i32
  }
  func.func @transform_2(%arg0: i32, %arg1: i32) -> (i32, i32) {
    %c1_i32 = arith.constant 1 : i32
    %0 = arith.muli %arg0, %c1_i32 : i32
    %1 = arith.addi %0, %arg1 : i32
    %c0_i32 = arith.constant 0 : i32
    %2 = arith.minsi %1, %c0_i32 : i32
    %c0_i32_0 = arith.constant 0 : i32
    %c0_i32_1 = arith.constant 0 : i32
    return %2, %c0_i32_0 : i32, i32
  }
  func.func @transform_3(%arg0: i32, %arg1: i32) -> (i32, i32) {
    %c0_i32 = arith.constant 0 : i32
    %c0_i32_0 = arith.constant 0 : i32
    return %arg0, %c0_i32 : i32, i32
  }
}

</mosaic_0001>

<llo_original>
// kernel: tpu_custom_call.1
$region0: #{tpu_custom_call.1}
  #allocation0 [shape = 'u32[]', space=smem, size = 0x4, offset = 0x4, fixed_abs, tag = 'smem constant byte address 0x4 - core index']
  #allocation1 [shape = 'u32[72,128]{1,0:T(1,128)}', space=vmem, size = 0x9000, scoped, tag = 'internal scratch']
  #allocation2 [shape = 'f32[8,128]{1,0:T(8,128)}', space=vmem, size = 0x1000, scoped, tag = 'scratch operand']
  #allocation3 [shape = 'f32[1]{0:T(128)S(6)}', space=smem, size = 0x200, scoped, tag = 'scoped memory for tpu_custom_call.1']
  %s0 = inlined_call_operand.<no memory space> [shape: f32[1], index: 0, kind: input, shape index: {}]
  %s1 = inlined_call_operand.hbm [shape: f32[8,128], index: 1, kind: input, shape index: {}]
  %s2 = inlined_call_operand.hbm [shape: f32[8,128], index: 2, kind: input, shape index: {}]
  %s3 = inlined_call_operand.hbm [shape: f32[8,128], index: 3, kind: output, shape index: {}]
  %s4 = sld [smem:[#allocation0]]
  $region38: #{tpu_custom_call.1} parent=0
    _
  %s6 = ssub.s32 1, %s4
  %s7 = scalar_select 0, %s6, %s4
  %8 = sst [smem:[#allocation3]] %s0
  $region1: #{tpu_custom_call.1} parent=0
    #allocation4 [shape = 'u8[4096]{0}', space=vmem, size = 0x1000, scoped, tag = 'input window, operand 1, single buffered']
    #allocation5 [shape = 's32[1]{0}', space=sflag, size = 0x4, scoped, tag = 'scoped memory for tpu_custom_call.1']
    #allocation6 [shape = 's32[1]{0}', space=sflag, size = 0x4, scoped, tag = 'scoped memory for tpu_custom_call.1']
    #allocation7 [shape = 'u8[4096]{0}', space=vmem, size = 0x1000, scoped, tag = 'input window, operand 2, single buffered']
    #allocation8 [shape = 's32[1]{0}', space=sflag, size = 0x4, scoped, tag = 'scoped memory for tpu_custom_call.1']
    #allocation9 [shape = 'u8[4096]{0}', space=vmem, size = 0x1000, scoped, tag = 'output window, operand 0, single buffered']
    %9 = vsyncpa [#allocation5], 0
    %10 = vsyncpa [#allocation8], 0
    %11 = vsyncpa [#allocation6], 0
    // Predicated region
    $region2: #{tpu_custom_call.1} parent=1 // pred_check
      _
    $region3: #{tpu_custom_call.1} parent=1 // pred_check_branch
      %13 = sbr.rel (0) target = $region5
    $region4: #{tpu_custom_call.1} parent=1 // pred_region
      _
    $region5: #{tpu_custom_call.1} parent=1 // pred_fallthru
      _
    // Predicated region
    $region6: #{tpu_custom_call.1} parent=1 // pred_check
      _
    $region7: #{tpu_custom_call.1} parent=1 // pred_check_branch
      %15 = sbr.rel (0) target = $region9
    $region8: #{tpu_custom_call.1} parent=1 // pred_region
      %s16 = sadd.s32 0, 0
      %p17 = scmp.lt.s32.totalorder %s16, 0
      %s18 = scalar_select %p17, %s16, 0
      %20 = vsyncadd [#allocation5], 0
      %s21 = smul.addr %s18, 8
      %s22 = scalar_lea.hbm %s1, %s21
      %s24 = sshll.u32 %s22, 4
      %s25 = int_to_ptr.hbm [resolvable:$true] %s24
      %s26 = sshll.u32 [#allocation4], 4
      %s27 = int_to_ptr.vmem [resolvable:$true] %s26
      %29 = dma.hbm_to_vmem [thread:$0]  %s25, 128, %s27, [#allocation5]
    $region9: #{tpu_custom_call.1} parent=1 // pred_fallthru
      _
    // Predicated region
    $region10: #{tpu_custom_call.1} parent=1 // pred_check
      _
    $region11: #{tpu_custom_call.1} parent=1 // pred_check_branch
      %31 = sbr.rel (0) target = $region13
    $region12: #{tpu_custom_call.1} parent=1 // pred_region
      %s32 = sadd.s32 0, 0
      %p33 = scmp.lt.s32.totalorder %s32, 0
      %s34 = scalar_select %p33, %s32, 0
      %36 = vsyncadd [#allocation8], 0
      %s37 = smul.addr %s34, 8
      %s38 = scalar_lea.hbm %s2, %s37
      %s40 = sshll.u32 %s38, 4
      %s41 = int_to_ptr.hbm [resolvable:$true] %s40
      %s42 = sshll.u32 [#allocation7], 4
      %s43 = int_to_ptr.vmem [resolvable:$true] %s42
      %45 = dma.hbm_to_vmem [thread:$0]  %s41, 128, %s43, [#allocation8]
    $region13: #{tpu_custom_call.1} parent=1 // pred_fallthru
      _
    // Predicated region
    $region14: #{tpu_custom_call.1} parent=1 // pred_check
      _
    $region15: #{tpu_custom_call.1} parent=1 // pred_check_branch
      %47 = sbr.rel (0) target = $region17
    $region16: #{tpu_custom_call.1} parent=1 // pred_region
      %49 = dma.done [#allocation5], 128
    $region17: #{tpu_custom_call.1} parent=1 // pred_fallthru
      _
    // Predicated region
    $region18: #{tpu_custom_call.1} parent=1 // pred_check
      _
    $region19: #{tpu_custom_call.1} parent=1 // pred_check_branch
      %51 = sbr.rel (0) target = $region21
    $region20: #{tpu_custom_call.1} parent=1 // pred_region
      %53 = dma.done [#allocation8], 128
    $region21: #{tpu_custom_call.1} parent=1 // pred_fallthru
      _
    %s54 = sadd.s32 0, 0
    %p55 = scmp.lt.s32.totalorder %s54, 0
    %s56 = scalar_select %p55, %s54, 0
    %s57 = sadd.s32 0, 0
    %p58 = scmp.lt.s32.totalorder %s57, 0
    %s59 = scalar_select %p58, %s57, 0
    %p60 = scmp.eq.s32.totalorder 0, 0
    // Predicated region
    $region22: #{tpu_custom_call.1} parent=1 // pred_check
      %p61 = pneg %p60
    $region23: #{tpu_custom_call.1} parent=1 // pred_check_branch
      %63 = sbr.rel (%p61) target = $region25
    $region24: #{tpu_custom_call.1} parent=1 // pred_region
      %64 = vst [vmem:[#allocation2] sm:$0xff] 0.0
    $region25: #{tpu_custom_call.1} parent=1 // pred_fallthru
      _
    %s65 = sadd.s32 0, 0
    %v66 = vlaneseq
    %v67 = vshrl.u32 %v66, 7
    %v68 = vlaneseq
    %v69 = vand.u32 %v68, 127
    %s70 = smul.u32 %s65, 8
    %v71 = vstv %s70
    %v72 = vadd.s32 %v71, %v67
    %v73 = vmul.u32 %v72, 128
    %v74 = vadd.s32 %v73, %v69
    %vm75 = vcmp.lt.s32.totalorder %v74, 512
    %v76 = vld [vmem:[#allocation4] sm:$0xff]
    %v77 = vsel %vm75, %v76, 0.0
    %v78 = vld [vmem:[#allocation7] sm:$0xff]
    %v79 = vsel %vm75, %v78, 0.0
    %s80 = sld [smem:[#allocation3]]
    %vm81 = vcmp.eq.f32.partialorder %v79, 1.0
    %v82 = vstv %s80
    %v83 = vmul.f32 %v82, %v79
    %v84 = vsub.f32 %v77, %v83
    %v85 = vsel %vm81, %v84, %v77
    %v86 = vmul.f32 %v85, 30.0
    %v87 = vmax.f32 %v86, 0.0
    %v88 = vmul.f32 %v86, %v79
    %v89 = vsub.f32 %v87, %v88
    %v90 = vand.u32 2147483647, %v86
    %v91 = vsub.f32 0.0, %v90
    %v92 = vmul.f32 %v91, 1.442695
    %v93 = vpow.pop %v92
    %v94 = vadd.f32 %v93, 1.0
    %v95 = vlog2.pop %v94
    %v96 = vmul.f32 %v95, 0.6931472
    %v97 = vmul.f32 -0.5, %v93
    %v98 = vadd.f32 %v97, 1.0
    %v99 = vmul.f32 %v98, %v93
    %v100 = vand.u32 2147483647, %v93
    %vm101 = vcmp.lt.f32.partialorder %v100, 0.0004427343
    %v102 = vsel %vm101, %v99, %v96
    %v103 = vadd.f32 %v89, %v102
    %v104 = vld [vmem:[#allocation2] sm:$0xff]
    %v105 = vsel %vm75, %v103, 0.0
    %v106 = vadd.f32 %v104, %v105
    %107 = vst [vmem:[#allocation2] sm:$0xff] %v106
    // Predicated region
    $region26: #{tpu_custom_call.1} parent=1 // pred_check
      %p108 = pneg %p60
    $region27: #{tpu_custom_call.1} parent=1 // pred_check_branch
      %110 = sbr.rel (%p108) target = $region29
    $region28: #{tpu_custom_call.1} parent=1 // pred_region
      %v111 = vld [vmem:[#allocation2] sm:$0xff]
      %112 = vst [vmem:[#allocation9] sm:$0xff] %v111
    $region29: #{tpu_custom_call.1} parent=1 // pred_fallthru
      _
    // Predicated region
    $region30: #{tpu_custom_call.1} parent=1 // pred_check
      _
    $region31: #{tpu_custom_call.1} parent=1 // pred_check_branch
      %114 = sbr.rel (0) target = $region33
    $region32: #{tpu_custom_call.1} parent=1 // pred_region
      %116 = vsyncadd [#allocation6], 0
      %s118 = sshll.u32 [#allocation9], 4
      %s119 = int_to_ptr.vmem [resolvable:$true] %s118
      %s120 = sshll.u32 %s3, 4
      %s121 = int_to_ptr.hbm [resolvable:$true] %s120
      %123 = dma.vmem_to_hbm [thread:$0]  %s119, 128, %s121, [#allocation6]
    $region33: #{tpu_custom_call.1} parent=1 // pred_fallthru
      _
    // Predicated region
    $region34: #{tpu_custom_call.1} parent=1 // pred_check
      _
    $region35: #{tpu_custom_call.1} parent=1 // pred_check_branch
      %125 = sbr.rel (0) target = $region37
    $region36: #{tpu_custom_call.1} parent=1 // pred_region
      %127 = dma.done [#allocation6], 128
    $region37: #{tpu_custom_call.1} parent=1 // pred_fallthru
      _
    %128 = vsyncpa [#allocation5], 1
    %129 = vsyncpa [#allocation8], 1
    %130 = vsyncpa [#allocation6], 1

</llo_original>
